<compile_context>
chip_gen: v6e
topology: v6e:2x2x1
jax: 0.10.0
libtpu: 0.0.40
codegen_flags: <defaults>
</compile_context>

<pallas_src>
import jax
import jax.numpy as jnp
import numpy as np
from jax.experimental import pallas as pl
from jax.experimental.pallas import tpu as pltpu


def _round_up(v, m):
    return (v + m - 1) // m * m


def gnn_kernel(eps_ref, x_ref, g_ref, s_ref, ea_ref, w_ref, scale_ref,
               shift_ref, wout_ref, bout_ref, out_ref):
    nlayer = w_ref.shape[0]

    # Layer-invariant operands: load once, keep in vregs/VMEM values.
    g = g_ref[...]                                   # (Ep, Np) bf16 one-hot
    s = s_ref[...]                                   # (Np, Ep) bf16 one-hot
    ea = ea_ref[...].astype(jnp.float32)             # (Ep, Dp)
    x = x_ref[...].astype(jnp.float32)               # (Np, Dp) carried state

    # Static (fully unrolled) layer loop; L is tiny so code bloat is negligible.
    for l in range(nlayer):
        # GINE message passing on the MXU (bf16 single-pass, f32 accumulate):
        #   m[i,:] = sum_{e : dst[e]=i} relu(x[src[e],:] + edge_attr[e,:])
        xe = jnp.dot(g, x.astype(jnp.bfloat16),
                     preferred_element_type=jnp.float32)            # (Ep, Dp)
        msg = jnp.maximum(xe + ea, 0.0)                              # (Ep, Dp)
        m = jnp.dot(s, msg.astype(jnp.bfloat16),
                    preferred_element_type=jnp.float32)              # (Np, Dp)

        # (1 + eps) * x_i + m_i, then the conv's linear (no bias since bn=True).
        h = (1.0 + eps_ref[l]) * x + m
        z = jnp.dot(h, w_ref[l], preferred_element_type=jnp.float32)

        # BatchNorm1d (eval) folded into an affine, then ReLU.
        z = z * scale_ref[l] + shift_ref[l]
        z = jnp.maximum(z, 0.0)
        # dropout: eval mode -> identity
        x = z + x                         # residual (previous_x == x here)

    # Output encoder (Linear nin -> nout, with bias).
    out_ref[...] = (
        jnp.dot(x, wout_ref[...], preferred_element_type=jnp.float32)
        + bout_ref[...]
    ).astype(out_ref.dtype)


def build_graph_matrices(edge_index, num_nodes):
    """One-hot gather/scatter matrices for a static graph.

    Built once on the host (numpy) and reused across forwards, instead of
    per-call XLA scatters.  Padded rows/cols are zero so they never contribute.
    """
    edge_index = np.asarray(edge_index)
    E = edge_index.shape[1]
    Np = _round_up(num_nodes, 8)
    Ep = _round_up(E, 128)          # accepted padding cost at toy sizes
    src, dst = edge_index[0], edge_index[1]
    gmat = np.zeros((Ep, Np), np.float32)
    gmat[np.arange(E), src] = 1.0                     # edge e <- x[src[e]]
    smat = np.zeros((Np, Ep), np.float32)
    smat[dst, np.arange(E)] = 1.0                     # node i <- sum over dst=i
    return (jnp.asarray(gmat, dtype=jnp.bfloat16),    # 0/1 exact in bf16
            jnp.asarray(smat, dtype=jnp.bfloat16))


def gnn_forward(x, gmat, smat, edge_attr, w_stack, eps, scale_stack,
                shift_stack, w_out, b_out):
    N, nin = x.shape
    L = w_stack.shape[0]
    nout = w_out.shape[1]
    E = edge_attr.shape[0]
    Ep, Np = gmat.shape

    Dp = _round_up(nin, 128)
    Op = _round_up(nout, 128)

    xp = jnp.zeros((Np, Dp), jnp.float32).at[:N, :nin].set(x)
    eap = jnp.zeros((Ep, Dp), jnp.bfloat16).at[:E, :nin].set(
        edge_attr.astype(jnp.bfloat16))
    wp = jnp.zeros((L, Dp, Dp), jnp.float32).at[:, :nin, :nin].set(w_stack)
    scp = jnp.ones((L, 1, Dp), jnp.float32).at[:, :, :nin].set(scale_stack)
    shp = jnp.zeros((L, 1, Dp), jnp.float32).at[:, :, :nin].set(shift_stack)
    wop = jnp.zeros((Dp, Op), jnp.float32).at[:nin, :nout].set(w_out)
    bop = jnp.zeros((1, Op), jnp.float32).at[:, :nout].set(b_out)
    eps_flat = eps.reshape(L).astype(jnp.float32)

    vmem = pltpu.MemorySpace.VMEM
    smem = pltpu.MemorySpace.SMEM

    out = pl.pallas_call(
        gnn_kernel,
        out_shape=jax.ShapeDtypeStruct((Np, Op), jnp.float32),
        in_specs=[
            pl.BlockSpec(memory_space=smem),   # eps (L,)       -> scalar path
            pl.BlockSpec(memory_space=vmem),   # x        (Np, Dp)
            pl.BlockSpec(memory_space=vmem),   # gather G (Ep, Np) bf16
            pl.BlockSpec(memory_space=vmem),   # scatter S (Np, Ep) bf16
            pl.BlockSpec(memory_space=vmem),   # edge attrs (Ep, Dp) bf16
            pl.BlockSpec(memory_space=vmem),   # W stack  (L, Dp, Dp)
            pl.BlockSpec(memory_space=vmem),   # bn scale (L, 1, Dp)
            pl.BlockSpec(memory_space=vmem),   # bn shift (L, 1, Dp)
            pl.BlockSpec(memory_space=vmem),   # output W (Dp, Op)
            pl.BlockSpec(memory_space=vmem),   # output b (1, Op)
        ],
        out_specs=pl.BlockSpec(memory_space=vmem),
    )(eps_flat, xp, gmat, smat, eap, wp, scp, shp, wop, bop)

    return out[:N, :nout]


def ref_forward(x, edge_index, edge_attr, w_stack, eps, scale_stack,
                shift_stack, w_out, b_out):
    """Pure-JAX f32 reference of the same semantics (correctness check)."""
    N, nin = x.shape
    src, dst = edge_index[0], edge_index[1]
    prev = x
    h = x
    for l in range(w_stack.shape[0]):
        msg = jnp.maximum(h[src] + edge_attr, 0.0)             # (E, nin)
        m = jnp.zeros((N, nin), jnp.float32).at[dst].add(msg)   # scatter-add
        z = ((1.0 + eps[l]) * h + m) @ w_stack[l]
        z = z * scale_stack[l, 0] + shift_stack[l, 0]
        z = jnp.maximum(z, 0.0)
        z = z + prev
        prev = z
        h = z
    return h @ w_out + b_out[0]


if __name__ == "__main__":
    # Small, module-consistent sizes: N nodes, nin features, nout outputs.
    N, nin, nout, nlayer = 32, 32, 16, 3
    num_edges = 2 * N  # bidirectional ring graph

    key = jax.random.PRNGKey(0)
    keys = jax.random.split(key, 10)

    # Node features.
    x = jax.random.normal(keys[0], (N, nin), dtype=jnp.float32)

    # Edge list (source, target): bidirectional ring -> static graph.
    src = np.concatenate([np.arange(N), (np.arange(N) + 1) % N])
    dst = np.concatenate([(np.arange(N) + 1) % N, np.arange(N)])
    edge_index = jnp.asarray(np.stack([src, dst]), dtype=jnp.int32)   # (2, E)
    edge_attr = jax.random.normal(keys[1], (num_edges, nin), dtype=jnp.float32)

    # Per-layer conv weights (Linear nin->nin, no bias since bn=True) and eps.
    w_stack = 0.1 * jax.random.normal(keys[2], (nlayer, nin, nin), jnp.float32)
    eps = 0.1 * jnp.arange(nlayer, dtype=jnp.float32)

    # BatchNorm1d (eval mode) folded to affine: scale = gamma/sqrt(var+1e-5),
    # shift = beta - mean*scale.
    gamma = 1.0 + 0.1 * jax.random.normal(keys[3], (nlayer, nin), jnp.float32)
    beta = 0.1 * jax.random.normal(keys[4], (nlayer, nin), jnp.float32)
    run_mean = 0.1 * jax.random.normal(keys[5], (nlayer, nin), jnp.float32)
    run_var = 1.0 + 0.1 * jnp.abs(
        jax.random.normal(keys[6], (nlayer, nin), jnp.float32))
    scale_stack = (gamma / jnp.sqrt(run_var + 1e-5)).reshape(nlayer, 1, nin)
    shift_stack = (beta - run_mean * gamma / jnp.sqrt(run_var + 1e-5)).reshape(
        nlayer, 1, nin)

    # Output encoder (MLP with nlayer=1, no final activation) = Linear + bias.
    w_out = 0.1 * jax.random.normal(keys[7], (nin, nout), jnp.float32)
    b_out = 0.1 * jax.random.normal(keys[8], (1, nout), jnp.float32)

    # One-hot gather/scatter: built once per static graph on the host.
    gmat, smat = build_graph_matrices(edge_index, N)

    fwd = jax.jit(gnn_forward)
    out = fwd(x, gmat, smat, edge_attr, w_stack, eps, scale_stack,
              shift_stack, w_out, b_out)
    out = jax.block_until_ready(out)

    ref = ref_forward(x, edge_index, edge_attr, w_stack, eps, scale_stack,
                      shift_stack, w_out, b_out)
    # Tolerance reflects the intentional bf16 message path (one-hot matrices
    # and gathered x / messages in bf16, f32 accumulation) vs a pure-f32 ref.
    np.testing.assert_allclose(np.asarray(out), np.asarray(ref),
                               rtol=2e-2, atol=2e-2)

    print("KERNEL_OK")
</pallas_src>

<mosaic_0001>
module attributes {stable_mosaic.version = 11 : i64} {
  func.func @gnn_kernel(%arg0: memref<3xf32, #tpu.memory_space<smem>>, %arg1: memref<32x128xf32, #tpu.memory_space<vmem>>, %arg2: memref<128x32xbf16, #tpu.memory_space<vmem>>, %arg3: memref<32x128xbf16, #tpu.memory_space<vmem>>, %arg4: memref<128x128xbf16, #tpu.memory_space<vmem>>, %arg5: memref<3x128x128xf32, #tpu.memory_space<vmem>>, %arg6: memref<3x1x128xf32, #tpu.memory_space<vmem>>, %arg7: memref<3x1x128xf32, #tpu.memory_space<vmem>>, %arg8: memref<128x128xf32, #tpu.memory_space<vmem>>, %arg9: memref<1x128xf32, #tpu.memory_space<vmem>>, %arg10: memref<32x128xf32, #tpu.memory_space<vmem>>) attributes {dimension_semantics = [], scalar_prefetch = 0 : i64, scratch_operands = 0 : i64, tpu.core_type = #tpu.core_type<tc>} {
    %c0 = arith.constant 0 : index
    %c0_0 = arith.constant 0 : index
    %0 = vector.load %arg2[%c0, %c0_0] : memref<128x32xbf16, #tpu.memory_space<vmem>>, vector<128x32xbf16>
    %c0_1 = arith.constant 0 : index
    %c0_2 = arith.constant 0 : index
    %1 = vector.load %arg3[%c0_1, %c0_2] : memref<32x128xbf16, #tpu.memory_space<vmem>>, vector<32x128xbf16>
    %c0_3 = arith.constant 0 : index
    %c0_4 = arith.constant 0 : index
    %2 = vector.load %arg4[%c0_3, %c0_4] : memref<128x128xbf16, #tpu.memory_space<vmem>>, vector<128x128xbf16>
    %3 = arith.extf %2 : vector<128x128xbf16> to vector<128x128xf32>
    %c0_5 = arith.constant 0 : index
    %c0_6 = arith.constant 0 : index
    %4 = vector.load %arg1[%c0_5, %c0_6] : memref<32x128xf32, #tpu.memory_space<vmem>>, vector<32x128xf32>
    %5 = arith.truncf %4 : vector<32x128xf32> to vector<32x128xbf16>
    %cst = arith.constant dense<0.000000e+00> : vector<128x128xf32>
    %6 = tpu.matmul %0, %5, %cst {dimension_numbers = #tpu.dot_dimension_numbers<[1], [0], [0], [1], [0, 0, 1, 1], [], []>} : vector<128x32xbf16>, vector<32x128xbf16>, vector<128x128xf32> -> vector<128x128xf32>
    %7 = arith.addf %6, %3 : vector<128x128xf32>
    %cst_7 = arith.constant 0.000000e+00 : f32
    %8 = vector.broadcast %cst_7 : f32 to vector<128x128xf32>
    %9 = arith.maximumf %7, %8 : vector<128x128xf32>
    %10 = arith.truncf %9 : vector<128x128xf32> to vector<128x128xbf16>
    %cst_8 = arith.constant dense<0.000000e+00> : vector<32x128xf32>
    %11 = tpu.matmul %1, %10, %cst_8 {dimension_numbers = #tpu.dot_dimension_numbers<[1], [0], [0], [1], [0, 0, 1, 1], [], []>} : vector<32x128xbf16>, vector<128x128xbf16>, vector<32x128xf32> -> vector<32x128xf32>
    %c0_9 = arith.constant 0 : index
    %12 = memref.load %arg0[%c0_9] : memref<3xf32, #tpu.memory_space<smem>>
    %cst_10 = arith.constant 1.000000e+00 : f32
    %13 = arith.addf %cst_10, %12 : f32
    %14 = vector.broadcast %13 : f32 to vector<32x128xf32>
    %15 = arith.mulf %14, %4 : vector<32x128xf32>
    %16 = arith.addf %15, %11 : vector<32x128xf32>
    %c0_11 = arith.constant 0 : index
    %c0_12 = arith.constant 0 : index
    %c0_13 = arith.constant 0 : index
    %17 = vector.load %arg5[%c0_11, %c0_12, %c0_13] : memref<3x128x128xf32, #tpu.memory_space<vmem>>, vector<1x128x128xf32>
    %18 = vector.shape_cast %17 : vector<1x128x128xf32> to vector<128x128xf32>
    %cst_14 = arith.constant dense<0.000000e+00> : vector<32x128xf32>
    %19 = tpu.matmul %16, %18, %cst_14 {dimension_numbers = #tpu.dot_dimension_numbers<[1], [0], [0], [1], [0, 0, 1, 1], [], []>} : vector<32x128xf32>, vector<128x128xf32>, vector<32x128xf32> -> vector<32x128xf32>
    %c0_15 = arith.constant 0 : index
    %c0_16 = arith.constant 0 : index
    %c0_17 = arith.constant 0 : index
    %20 = vector.load %arg6[%c0_15, %c0_16, %c0_17] : memref<3x1x128xf32, #tpu.memory_space<vmem>>, vector<1x1x128xf32>
    %21 = vector.shape_cast %20 : vector<1x1x128xf32> to vector<1x128xf32>
    %22 = vector.broadcast %21 : vector<1x128xf32> to vector<32x128xf32>
    %23 = arith.mulf %19, %22 : vector<32x128xf32>
    %c0_18 = arith.constant 0 : index
    %c0_19 = arith.constant 0 : index
    %c0_20 = arith.constant 0 : index
    %24 = vector.load %arg7[%c0_18, %c0_19, %c0_20] : memref<3x1x128xf32, #tpu.memory_space<vmem>>, vector<1x1x128xf32>
    %25 = vector.shape_cast %24 : vector<1x1x128xf32> to vector<1x128xf32>
    %26 = vector.broadcast %25 : vector<1x128xf32> to vector<32x128xf32>
    %27 = arith.addf %23, %26 : vector<32x128xf32>
    %cst_21 = arith.constant 0.000000e+00 : f32
    %28 = vector.broadcast %cst_21 : f32 to vector<32x128xf32>
    %29 = arith.maximumf %27, %28 : vector<32x128xf32>
    %30 = arith.addf %29, %4 : vector<32x128xf32>
    %31 = arith.truncf %30 : vector<32x128xf32> to vector<32x128xbf16>
    %cst_22 = arith.constant dense<0.000000e+00> : vector<128x128xf32>
    %32 = tpu.matmul %0, %31, %cst_22 {dimension_numbers = #tpu.dot_dimension_numbers<[1], [0], [0], [1], [0, 0, 1, 1], [], []>} : vector<128x32xbf16>, vector<32x128xbf16>, vector<128x128xf32> -> vector<128x128xf32>
    %33 = arith.addf %32, %3 : vector<128x128xf32>
    %cst_23 = arith.constant 0.000000e+00 : f32
    %34 = vector.broadcast %cst_23 : f32 to vector<128x128xf32>
    %35 = arith.maximumf %33, %34 : vector<128x128xf32>
    %36 = arith.truncf %35 : vector<128x128xf32> to vector<128x128xbf16>
    %cst_24 = arith.constant dense<0.000000e+00> : vector<32x128xf32>
    %37 = tpu.matmul %1, %36, %cst_24 {dimension_numbers = #tpu.dot_dimension_numbers<[1], [0], [0], [1], [0, 0, 1, 1], [], []>} : vector<32x128xbf16>, vector<128x128xbf16>, vector<32x128xf32> -> vector<32x128xf32>
    %c1 = arith.constant 1 : index
    %38 = memref.load %arg0[%c1] : memref<3xf32, #tpu.memory_space<smem>>
    %cst_25 = arith.constant 1.000000e+00 : f32
    %39 = arith.addf %cst_25, %38 : f32
    %40 = vector.broadcast %39 : f32 to vector<32x128xf32>
    %41 = arith.mulf %40, %30 : vector<32x128xf32>
    %42 = arith.addf %41, %37 : vector<32x128xf32>
    %c1_26 = arith.constant 1 : index
    %c0_27 = arith.constant 0 : index
    %c0_28 = arith.constant 0 : index
    %43 = vector.load %arg5[%c1_26, %c0_27, %c0_28] : memref<3x128x128xf32, #tpu.memory_space<vmem>>, vector<1x128x128xf32>
    %44 = vector.shape_cast %43 : vector<1x128x128xf32> to vector<128x128xf32>
    %cst_29 = arith.constant dense<0.000000e+00> : vector<32x128xf32>
    %45 = tpu.matmul %42, %44, %cst_29 {dimension_numbers = #tpu.dot_dimension_numbers<[1], [0], [0], [1], [0, 0, 1, 1], [], []>} : vector<32x128xf32>, vector<128x128xf32>, vector<32x128xf32> -> vector<32x128xf32>
    %c1_30 = arith.constant 1 : index
    %c0_31 = arith.constant 0 : index
    %c0_32 = arith.constant 0 : index
    %46 = vector.load %arg6[%c1_30, %c0_31, %c0_32] : memref<3x1x128xf32, #tpu.memory_space<vmem>>, vector<1x1x128xf32>
    %47 = vector.shape_cast %46 : vector<1x1x128xf32> to vector<1x128xf32>
    %48 = vector.broadcast %47 : vector<1x128xf32> to vector<32x128xf32>
    %49 = arith.mulf %45, %48 : vector<32x128xf32>
    %c1_33 = arith.constant 1 : index
    %c0_34 = arith.constant 0 : index
    %c0_35 = arith.constant 0 : index
    %50 = vector.load %arg7[%c1_33, %c0_34, %c0_35] : memref<3x1x128xf32, #tpu.memory_space<vmem>>, vector<1x1x128xf32>
    %51 = vector.shape_cast %50 : vector<1x1x128xf32> to vector<1x128xf32>
    %52 = vector.broadcast %51 : vector<1x128xf32> to vector<32x128xf32>
    %53 = arith.addf %49, %52 : vector<32x128xf32>
    %cst_36 = arith.constant 0.000000e+00 : f32
    %54 = vector.broadcast %cst_36 : f32 to vector<32x128xf32>
    %55 = arith.maximumf %53, %54 : vector<32x128xf32>
    %56 = arith.addf %55, %30 : vector<32x128xf32>
    %57 = arith.truncf %56 : vector<32x128xf32> to vector<32x128xbf16>
    %cst_37 = arith.constant dense<0.000000e+00> : vector<128x128xf32>
    %58 = tpu.matmul %0, %57, %cst_37 {dimension_numbers = #tpu.dot_dimension_numbers<[1], [0], [0], [1], [0, 0, 1, 1], [], []>} : vector<128x32xbf16>, vector<32x128xbf16>, vector<128x128xf32> -> vector<128x128xf32>
    %59 = arith.addf %58, %3 : vector<128x128xf32>
    %cst_38 = arith.constant 0.000000e+00 : f32
    %60 = vector.broadcast %cst_38 : f32 to vector<128x128xf32>
    %61 = arith.maximumf %59, %60 : vector<128x128xf32>
    %62 = arith.truncf %61 : vector<128x128xf32> to vector<128x128xbf16>
    %cst_39 = arith.constant dense<0.000000e+00> : vector<32x128xf32>
    %63 = tpu.matmul %1, %62, %cst_39 {dimension_numbers = #tpu.dot_dimension_numbers<[1], [0], [0], [1], [0, 0, 1, 1], [], []>} : vector<32x128xbf16>, vector<128x128xbf16>, vector<32x128xf32> -> vector<32x128xf32>
    %c2 = arith.constant 2 : index
    %64 = memref.load %arg0[%c2] : memref<3xf32, #tpu.memory_space<smem>>
    %cst_40 = arith.constant 1.000000e+00 : f32
    %65 = arith.addf %cst_40, %64 : f32
    %66 = vector.broadcast %65 : f32 to vector<32x128xf32>
    %67 = arith.mulf %66, %56 : vector<32x128xf32>
    %68 = arith.addf %67, %63 : vector<32x128xf32>
    %c2_41 = arith.constant 2 : index
    %c0_42 = arith.constant 0 : index
    %c0_43 = arith.constant 0 : index
    %69 = vector.load %arg5[%c2_41, %c0_42, %c0_43] : memref<3x128x128xf32, #tpu.memory_space<vmem>>, vector<1x128x128xf32>
    %70 = vector.shape_cast %69 : vector<1x128x128xf32> to vector<128x128xf32>
    %cst_44 = arith.constant dense<0.000000e+00> : vector<32x128xf32>
    %71 = tpu.matmul %68, %70, %cst_44 {dimension_numbers = #tpu.dot_dimension_numbers<[1], [0], [0], [1], [0, 0, 1, 1], [], []>} : vector<32x128xf32>, vector<128x128xf32>, vector<32x128xf32> -> vector<32x128xf32>
    %c2_45 = arith.constant 2 : index
    %c0_46 = arith.constant 0 : index
    %c0_47 = arith.constant 0 : index
    %72 = vector.load %arg6[%c2_45, %c0_46, %c0_47] : memref<3x1x128xf32, #tpu.memory_space<vmem>>, vector<1x1x128xf32>
    %73 = vector.shape_cast %72 : vector<1x1x128xf32> to vector<1x128xf32>
    %74 = vector.broadcast %73 : vector<1x128xf32> to vector<32x128xf32>
    %75 = arith.mulf %71, %74 : vector<32x128xf32>
    %c2_48 = arith.constant 2 : index
    %c0_49 = arith.constant 0 : index
    %c0_50 = arith.constant 0 : index
    %76 = vector.load %arg7[%c2_48, %c0_49, %c0_50] : memref<3x1x128xf32, #tpu.memory_space<vmem>>, vector<1x1x128xf32>
    %77 = vector.shape_cast %76 : vector<1x1x128xf32> to vector<1x128xf32>
    %78 = vector.broadcast %77 : vector<1x128xf32> to vector<32x128xf32>
    %79 = arith.addf %75, %78 : vector<32x128xf32>
    %cst_51 = arith.constant 0.000000e+00 : f32
    %80 = vector.broadcast %cst_51 : f32 to vector<32x128xf32>
    %81 = arith.maximumf %79, %80 : vector<32x128xf32>
    %82 = arith.addf %81, %56 : vector<32x128xf32>
    %c0_52 = arith.constant 0 : index
    %c0_53 = arith.constant 0 : index
    %83 = vector.load %arg8[%c0_52, %c0_53] : memref<128x128xf32, #tpu.memory_space<vmem>>, vector<128x128xf32>
    %cst_54 = arith.constant dense<0.000000e+00> : vector<32x128xf32>
    %84 = tpu.matmul %82, %83, %cst_54 {dimension_numbers = #tpu.dot_dimension_numbers<[1], [0], [0], [1], [0, 0, 1, 1], [], []>} : vector<32x128xf32>, vector<128x128xf32>, vector<32x128xf32> -> vector<32x128xf32>
    %c0_55 = arith.constant 0 : index
    %c0_56 = arith.constant 0 : index
    %85 = vector.load %arg9[%c0_55, %c0_56] : memref<1x128xf32, #tpu.memory_space<vmem>>, vector<1x128xf32>
    %86 = vector.broadcast %85 : vector<1x128xf32> to vector<32x128xf32>
    %87 = arith.addf %84, %86 : vector<32x128xf32>
    %c0_57 = arith.constant 0 : index
    %c0_58 = arith.constant 0 : index
    %88 = vector.load %arg10[%c0_57, %c0_58] : memref<32x128xf32, #tpu.memory_space<vmem>>, vector<32x128xf32>
    tpu.vector_store %arg10[%c0_57, %c0_58], %87 {strides = array<i32>} : memref<32x128xf32, #tpu.memory_space<vmem>>, vector<32x128xf32>,
    return
  }
}

</mosaic_0001>

<llo_original>
// kernel: gnn_forward.1
$region0: #{gnn_forward.1}
  #allocation0 [shape = 'u32[]', space=smem, size = 0x4, offset = 0x4, fixed_abs, tag = 'smem constant byte address 0x4 - core index']
  #allocation1 [shape = 'u32[144,128]{1,0:T(1,128)}', space=vmem, size = 0x12000, scoped, tag = 'internal scratch']
  %s0 = inlined_call_operand.vmem [shape: f32[3], index: 0, kind: input, shape index: {}]
  %s1 = inlined_call_operand.vmem [shape: f32[32,128], index: 1, kind: input, shape index: {}]
  %s2 = inlined_call_operand.vmem [shape: bf16[128,32], index: 2, kind: input, shape index: {}]
  %s3 = inlined_call_operand.vmem [shape: bf16[32,128], index: 3, kind: input, shape index: {}]
  %s4 = inlined_call_operand.vmem [shape: bf16[128,128], index: 4, kind: input, shape index: {}]
  %s5 = inlined_call_operand.vmem [shape: f32[3,128,128], index: 5, kind: input, shape index: {}]
  %s6 = inlined_call_operand.vmem [shape: f32[3,1,128], index: 6, kind: input, shape index: {}]
  %s7 = inlined_call_operand.vmem [shape: f32[3,1,128], index: 7, kind: input, shape index: {}]
  %s8 = inlined_call_operand.vmem [shape: f32[128,128], index: 8, kind: input, shape index: {}]
  %s9 = inlined_call_operand.vmem [shape: f32[1,128], index: 9, kind: input, shape index: {}]
  %s10 = inlined_call_operand.vmem [shape: f32[32,128], index: 10, kind: output, shape index: {}]
  %s11 = sld [smem:[#allocation0]]
  $region54: #{gnn_forward.1} parent=0
    _
  %s13 = ssub.s32 1, %s11
  %s14 = scalar_select 0, %s13, %s11
  $region1: #{gnn_forward.1} parent=0
    #allocation2 [shape = 'u8[512]{0}', space=smem, size = 0x200, scoped, tag = 'input window, operand 0, single buffered']
    #allocation3 [shape = 's32[1]{0}', space=sflag, size = 0x4, scoped, tag = 'scoped memory for gnn_forward.1']
    %15 = vsyncpa [#allocation3], 0
    // Predicated region
    $region2: #{gnn_forward.1} parent=1 // pred_check
      _
    $region3: #{gnn_forward.1} parent=1 // pred_check_branch
      %17 = sbr.rel (0) target = $region5
    $region4: #{gnn_forward.1} parent=1 // pred_region
      %s19 = ssub.s32 16, 16
      %20 = vsyncadd [#allocation3], %s19
      %s22 = sshll.u32 %s0, 4
      %s23 = int_to_ptr.vmem [resolvable:$true] %s22
      %25 = dma.vmem_to_smem %s23, 16, [#allocation2], [#allocation3]
    $region5: #{gnn_forward.1} parent=1 // pred_fallthru
      _
    // Predicated region
    $region6: #{gnn_forward.1} parent=1 // pred_check
      _
    $region7: #{gnn_forward.1} parent=1 // pred_check_branch
      %27 = sbr.rel (0) target = $region9
    $region8: #{gnn_forward.1} parent=1 // pred_region
      _
    $region9: #{gnn_forward.1} parent=1 // pred_fallthru
      _
    // Predicated region
    $region10: #{gnn_forward.1} parent=1 // pred_check
      _
    $region11: #{gnn_forward.1} parent=1 // pred_check_branch
      %29 = sbr.rel (0) target = $region13
    $region12: #{gnn_forward.1} parent=1 // pred_region
      _
    $region13: #{gnn_forward.1} parent=1 // pred_fallthru
      _
    // Predicated region
    $region14: #{gnn_forward.1} parent=1 // pred_check
      _
    $region15: #{gnn_forward.1} parent=1 // pred_check_branch
      %31 = sbr.rel (0) target = $region17
    $region16: #{gnn_forward.1} parent=1 // pred_region
      _
    $region17: #{gnn_forward.1} parent=1 // pred_fallthru
      _
    // Predicated region
    $region18: #{gnn_forward.1} parent=1 // pred_check
      _
    $region19: #{gnn_forward.1} parent=1 // pred_check_branch
      %33 = sbr.rel (0) target = $region21
    $region20: #{gnn_forward.1} parent=1 // pred_region
      _
    $region21: #{gnn_forward.1} parent=1 // pred_fallthru
      _
    // Predicated region
    $region22: #{gnn_forward.1} parent=1 // pred_check
      _
    $region23: #{gnn_forward.1} parent=1 // pred_check_branch
      %35 = sbr.rel (0) target = $region25
    $region24: #{gnn_forward.1} parent=1 // pred_region
      _
    $region25: #{gnn_forward.1} parent=1 // pred_fallthru
      _
    // Predicated region
    $region26: #{gnn_forward.1} parent=1 // pred_check
      _
    $region27: #{gnn_forward.1} parent=1 // pred_check_branch
      %37 = sbr.rel (0) target = $region29
    $region28: #{gnn_forward.1} parent=1 // pred_region
      _
    $region29: #{gnn_forward.1} parent=1 // pred_fallthru
      _
    // Predicated region
    $region30: #{gnn_forward.1} parent=1 // pred_check
      _
    $region31: #{gnn_forward.1} parent=1 // pred_check_branch
      %39 = sbr.rel (0) target = $region33
    $region32: #{gnn_forward.1} parent=1 // pred_region
      _
    $region33: #{gnn_forward.1} parent=1 // pred_fallthru
      _
    // Predicated region
    $region34: #{gnn_forward.1} parent=1 // pred_check
      _
    $region35: #{gnn_forward.1} parent=1 // pred_check_branch
      %41 = sbr.rel (0) target = $region37
    $region36: #{gnn_forward.1} parent=1 // pred_region
      _
    $region37: #{gnn_forward.1} parent=1 // pred_fallthru
      _
    // Predicated region
    $region38: #{gnn_forward.1} parent=1 // pred_check
      _
    $region39: #{gnn_forward.1} parent=1 // pred_check_branch
      %43 = sbr.rel (0) target = $region41
    $region40: #{gnn_forward.1} parent=1 // pred_region
      _
    $region41: #{gnn_forward.1} parent=1 // pred_fallthru
      _
    // Predicated region
    $region42: #{gnn_forward.1} parent=1 // pred_check
      _
    $region43: #{gnn_forward.1} parent=1 // pred_check_branch
      %45 = sbr.rel (0) target = $region45
    $region44: #{gnn_forward.1} parent=1 // pred_region
      %46 = dma.done [#allocation3], 16
    $region45: #{gnn_forward.1} parent=1 // pred_fallthru
      _
    %47 = sfence
    %v49 = vld [vmem:[%s2] sm:$0xf]
    %v50 = vld [vmem:[%s2 + $0x4] sm:$0xf]
    %v51 = vld [vmem:[%s2 + $0x8] sm:$0xf]
    %v52 = vld [vmem:[%s2 + $0xc] sm:$0xf]
    %v53 = vld [vmem:[%s2 + $0x10] sm:$0xf]
    %v54 = vld [vmem:[%s2 + $0x14] sm:$0xf]
    %v55 = vld [vmem:[%s2 + $0x18] sm:$0xf]
    %v56 = vld [vmem:[%s2 + $0x1c] sm:$0xf]
    %v57 = vld [vmem:[%s2 + $0x20] sm:$0xf]
    %v58 = vld [vmem:[%s2 + $0x24] sm:$0xf]
    %v59 = vld [vmem:[%s2 + $0x28] sm:$0xf]
    %v60 = vld [vmem:[%s2 + $0x2c] sm:$0xf]
    %v61 = vld [vmem:[%s2 + $0x30] sm:$0xf]
    %v62 = vld [vmem:[%s2 + $0x34] sm:$0xf]
    %v63 = vld [vmem:[%s2 + $0x38] sm:$0xf]
    %v64 = vld [vmem:[%s2 + $0x3c] sm:$0xf]
    %v65 = vld [vmem:[%s3] sm:$0xf]
    %v66 = vld [vmem:[%s3 + $0x4] sm:$0xf]
    %v67 = vld [vmem:[%s3 + $0x8] sm:$0xf]
    %v68 = vld [vmem:[%s3 + $0xc] sm:$0xf]
    %v69 = vld [vmem:[%s4] sm:$0xf]
    %v70 = vld [vmem:[%s4 + $0x4] sm:$0xf]
    %v71 = vld [vmem:[%s4 + $0x8] sm:$0xf]
    %v72 = vld [vmem:[%s4 + $0xc] sm:$0xf]
    %v73 = vld [vmem:[%s4 + $0x10] sm:$0xf]
    %v74 = vld [vmem:[%s4 + $0x14] sm:$0xf]
    %v75 = vld [vmem:[%s4 + $0x18] sm:$0xf]
    %v76 = vld [vmem:[%s4 + $0x1c] sm:$0xf]
    %v77 = vld [vmem:[%s4 + $0x20] sm:$0xf]
    %v78 = vld [vmem:[%s4 + $0x24] sm:$0xf]
    %v79 = vld [vmem:[%s4 + $0x28] sm:$0xf]
    %v80 = vld [vmem:[%s4 + $0x2c] sm:$0xf]
    %v81 = vld [vmem:[%s4 + $0x30] sm:$0xf]
    %v82 = vld [vmem:[%s4 + $0x34] sm:$0xf]
    %v83 = vld [vmem:[%s4 + $0x38] sm:$0xf]
    %v84 = vld [vmem:[%s4 + $0x3c] sm:$0xf]
    %v85 = vunpack.c.l.bf16 %v69
    %v86 = vunpack.c.l.bf16 %v70
    %v87 = vunpack.c.l.bf16 %v71
    %v88 = vunpack.c.l.bf16 %v72
    %v89 = vunpack.c.l.bf16 %v73
    %v90 = vunpack.c.l.bf16 %v74
    %v91 = vunpack.c.l.bf16 %v75
    %v92 = vunpack.c.l.bf16 %v76
    %v93 = vunpack.c.l.bf16 %v77
    %v94 = vunpack.c.l.bf16 %v78
    %v95 = vunpack.c.l.bf16 %v79
    %v96 = vunpack.c.l.bf16 %v80
    %v97 = vunpack.c.l.bf16 %v81
    %v98 = vunpack.c.l.bf16 %v82
    %v99 = vunpack.c.l.bf16 %v83
    %v100 = vunpack.c.l.bf16 %v84
    %v101 = vld [vmem:[%s1] sm:$0xff]
    %v102 = vld [vmem:[%s1 + $0x8] sm:$0xff]
    %v103 = vld [vmem:[%s1 + $0x10] sm:$0xff]
    %v104 = vld [vmem:[%s1 + $0x18] sm:$0xff]
    %v105 = vpack.c.bf16 %v102, %v101
    %v106 = vpack.c.bf16 %v104, %v103
    %v123 = vunpack.c.l.b16 %v49
    %v124 = vunpack.c.l.b16 %v50
    %v125 = vunpack.c.l.b16 %v51
    %v126 = vunpack.c.l.b16 %v52
    %v127 = vunpack.c.l.b16 %v53
    %v128 = vunpack.c.l.b16 %v54
    %v129 = vunpack.c.l.b16 %v55
    %v130 = vunpack.c.l.b16 %v56
    %v131 = vunpack.c.l.b16 %v57
    %v132 = vunpack.c.l.b16 %v58
    %v133 = vunpack.c.l.b16 %v59
    %v134 = vunpack.c.l.b16 %v60
    %v135 = vunpack.c.l.b16 %v61
    %v136 = vunpack.c.l.b16 %v62
    %v137 = vunpack.c.l.b16 %v63
    %v138 = vunpack.c.l.b16 %v64
    %v139 = vpack.c.b16 %v124, %v123
    %v140 = vpack.c.b16 %v126, %v125
    %v141 = vpack.c.b16 %v128, %v127
    %v142 = vpack.c.b16 %v130, %v129
    %v143 = vpack.c.b16 %v132, %v131
    %v144 = vpack.c.b16 %v134, %v133
    %v145 = vpack.c.b16 %v136, %v135
    %v146 = vpack.c.b16 %v138, %v137
    %vm147 = vcmask 261120
    %v149 = vsel %vm147, %v139, 0
    %v152 = vsel %vm147, %v140, 0
    %v155 = vsel %vm147, %v141, 0
    %v158 = vsel %vm147, %v142, 0
    %v161 = vsel %vm147, %v143, 0
    %v164 = vsel %vm147, %v144, 0
    %v167 = vsel %vm147, %v145, 0
    %v170 = vsel %vm147, %v146, 0
    %172 = vmatprep.subr.bf16.mxu0 0
    %173 = vmatpush1.bf16.msra.mxu0 0
    %174 = vmatprep.subr.bf16.mxu0 0
    %175 = vmatpush1.bf16.msra.mxu0 0
    %176 = vmatprep.subr.bf16.mxu0 0
    %177 = vmatpush1.bf16.msra.mxu0 0
    %178 = vmatprep.subr.bf16.mxu0 0
    %179 = vmatpush1.bf16.msra.mxu0 0
    %180 = vmatprep.subr.bf16.mxu0 0
    %181 = vmatpush1.bf16.msra.mxu0 0
    %182 = vmatprep.subr.bf16.mxu0 0
    %183 = vmatpush1.bf16.msra.mxu0 0
    %184 = vmatprep.subr.bf16.mxu0 0
    %185 = vmatpush1.bf16.msra.mxu0 %v106
    %186 = vmatprep.subr.bf16.mxu0 0
    %187 = vmatpush1.bf16.msra.mxu0 %v105
    %188 = vmatprep.subr.bf16.mxu0 0
    %189 = vmatpush2.bf16.msra.mxu0 0
    %190 = vmatprep.subr.bf16.mxu0 0
    %191 = vmatpush2.bf16.msra.mxu0 0
    %192 = vmatprep.subr.bf16.mxu0 0
    %193 = vmatpush2.bf16.msra.mxu0 0
    %194 = vmatprep.subr.bf16.mxu0 0
    %195 = vmatpush2.bf16.msra.mxu0 0
    %196 = vmatprep.subr.bf16.mxu0 0
    %197 = vmatpush2.bf16.msra.mxu0 0
    %198 = vmatprep.subr.bf16.mxu0 0
    %199 = vmatpush2.bf16.msra.mxu0 0
    %200 = vmatprep.subr.bf16.mxu0 0
    %201 = vmatpush2.bf16.msra.mxu0 0
    %202 = vmatprep.subr.bf16.mxu0 0
    %203 = vmatpush2.bf16.msra.mxu0 0
    %204 = vmatprep.mubr.bf16.mxu0 0
    %205 = vmatmul.mubr.bf16.gmra.mxu0 %v149
    %v206 = vpop.f32.mrf.mxu0
    %v207 = vadd.f32 %v85, %v206
    %v208 = vpop.f32.mrf.mxu0
    %v209 = vpop.f32.mrf.mxu0
    %v210 = vadd.f32 %v86, %v209
    %v211 = vpop.f32.mrf.mxu0
    %212 = vmatprep.mubr.bf16.mxu0 0
    %213 = vmatmul.mubr.bf16.gmra.mxu0 %v152
    %v214 = vpop.f32.mrf.mxu0
    %v215 = vadd.f32 %v87, %v214
    %v216 = vpop.f32.mrf.mxu0
    %v217 = vpop.f32.mrf.mxu0
    %v218 = vadd.f32 %v88, %v217
    %v219 = vpop.f32.mrf.mxu0
    %220 = vmatprep.mubr.bf16.mxu0 0
    %221 = vmatmul.mubr.bf16.gmra.mxu0 %v155
    %v222 = vpop.f32.mrf.mxu0
    %v223 = vadd.f32 %v89, %v222
    %v224 = vpop.f32.mrf.mxu0
    %v225 = vpop.f32.mrf.mxu0
    %v226 = vadd.f32 %v90, %v225
    %v227 = vpop.f32.mrf.mxu0
    %228 = vmatprep.mubr.bf16.mxu0 0
    %229 = vmatmul.mubr.bf16.gmra.mxu0 %v158
    %v230 = vpop.f32.mrf.mxu0
    %v231 = vadd.f32 %v91, %v230
    %v232 = vpop.f32.mrf.mxu0
    %v233 = vpop.f32.mrf.mxu0
    %v234 = vadd.f32 %v92, %v233
    %v235 = vpop.f32.mrf.mxu0
    %236 = vmatprep.mubr.bf16.mxu0 0
    %237 = vmatmul.mubr.bf16.gmra.mxu0 %v161
    %v238 = vpop.f32.mrf.mxu0
    %v239 = vadd.f32 %v93, %v238
    %v240 = vpop.f32.mrf.mxu0
    %v241 = vpop.f32.mrf.mxu0
    %v242 = vadd.f32 %v94, %v241
    %v243 = vpop.f32.mrf.mxu0
    %244 = vmatprep.mubr.bf16.mxu0 0
    %245 = vmatmul.mubr.bf16.gmra.mxu0 %v164
    %v246 = vpop.f32.mrf.mxu0
    %v247 = vadd.f32 %v95, %v246
    %v248 = vpop.f32.mrf.mxu0
    %v249 = vpop.f32.mrf.mxu0
    %v250 = vadd.f32 %v96, %v249
    %v251 = vpop.f32.mrf.mxu0
    %252 = vmatprep.mubr.bf16.mxu0 0
    %253 = vmatmul.mubr.bf16.gmra.mxu0 %v167
    %v254 = vpop.f32.mrf.mxu0
    %v255 = vadd.f32 %v97, %v254
    %v256 = vpop.f32.mrf.mxu0
    %v257 = vpop.f32.mrf.mxu0
    %v258 = vadd.f32 %v98, %v257
    %v259 = vpop.f32.mrf.mxu0
    %260 = vmatprep.mubr.bf16.mxu0 0
    %261 = vmatmul.mubr.bf16.gmra.mxu0 %v170
    %v262 = vpop.f32.mrf.mxu0
    %v263 = vadd.f32 %v99, %v262
    %v264 = vpop.f32.mrf.mxu0
    %v265 = vpop.f32.mrf.mxu0
    %v266 = vadd.f32 %v100, %v265
    %v267 = vpop.f32.mrf.mxu0
    %268 = vdwg.mxu0
    %v269 = vmax.f32 %v207, 0.0
    %v270 = vmax.f32 %v210, 0.0
    %v271 = vmax.f32 %v215, 0.0
    %v272 = vmax.f32 %v218, 0.0
    %v273 = vmax.f32 %v223, 0.0
    %v274 = vmax.f32 %v226, 0.0
    %v275 = vmax.f32 %v231, 0.0
    %v276 = vmax.f32 %v234, 0.0
    %v277 = vmax.f32 %v239, 0.0
    %v278 = vmax.f32 %v242, 0.0
    %v279 = vmax.f32 %v247, 0.0
    %v280 = vmax.f32 %v250, 0.0
    %v281 = vmax.f32 %v255, 0.0
    %v282 = vmax.f32 %v258, 0.0
    %v283 = vmax.f32 %v263, 0.0
    %v284 = vmax.f32 %v266, 0.0
    %v285 = vpack.c.bf16 %v270, %v269
    %v286 = vpack.c.bf16 %v272, %v271
    %v287 = vpack.c.bf16 %v274, %v273
    %v288 = vpack.c.bf16 %v276, %v275
    %v289 = vpack.c.bf16 %v278, %v277
    %v290 = vpack.c.bf16 %v280, %v279
    %v291 = vpack.c.bf16 %v282, %v281
    %v292 = vpack.c.bf16 %v284, %v283
    %v297 = vunpack.c.l.b16 %v65
    %v298 = vunpack.c.l.b16 %v66
    %v299 = vunpack.c.l.b16 %v67
    %v300 = vunpack.c.l.b16 %v68
    %v301 = vpack.c.b16 %v298, %v297
    %v302 = vpack.c.b16 %v300, %v299
    %305 = vmatprep.subr.bf16.mxu0 0
    %306 = vmatpush1.bf16.msra.mxu0 %v292
    %307 = vmatprep.subr.bf16.mxu0 0
    %308 = vmatpush1.bf16.msra.mxu0 %v291
    %309 = vmatprep.subr.bf16.mxu0 0
    %310 = vmatpush1.bf16.msra.mxu0 %v290
    %311 = vmatprep.subr.bf16.mxu0 0
    %312 = vmatpush1.bf16.msra.mxu0 %v289
    %313 = vmatprep.subr.bf16.mxu0 0
    %314 = vmatpush1.bf16.msra.mxu0 %v288
    %315 = vmatprep.subr.bf16.mxu0 0
    %316 = vmatpush1.bf16.msra.mxu0 %v287
    %317 = vmatprep.subr.bf16.mxu0 0
    %318 = vmatpush1.bf16.msra.mxu0 %v286
    %319 = vmatprep.subr.bf16.mxu0 0
    %320 = vmatpush1.bf16.msra.mxu0 %v285
    %321 = vmatprep.subr.bf16.mxu0 0
    %322 = vmatpush2.bf16.msra.mxu0 0
    %323 = vmatprep.subr.bf16.mxu0 0
    %324 = vmatpush2.bf16.msra.mxu0 0
    %325 = vmatprep.subr.bf16.mxu0 0
    %326 = vmatpush2.bf16.msra.mxu0 0
    %327 = vmatprep.subr.bf16.mxu0 0
    %328 = vmatpush2.bf16.msra.mxu0 0
    %329 = vmatprep.subr.bf16.mxu0 0
    %330 = vmatpush2.bf16.msra.mxu0 0
    %331 = vmatprep.subr.bf16.mxu0 0
    %332 = vmatpush2.bf16.msra.mxu0 0
    %333 = vmatprep.subr.bf16.mxu0 0
    %334 = vmatpush2.bf16.msra.mxu0 0
    %335 = vmatprep.subr.bf16.mxu0 0
    %336 = vmatpush2.bf16.msra.mxu0 0
    %337 = vmatprep.mubr.bf16.mxu0 0
    %338 = vmatmul.mubr.bf16.gmra.mxu0 %v301
    %v339 = vpop.f32.mrf.mxu0
    %v340 = vadd.f32 0.0, %v339
    %v341 = vpop.f32.mrf.mxu0
    %v342 = vpop.f32.mrf.mxu0
    %v343 = vadd.f32 0.0, %v342
    %v344 = vpop.f32.mrf.mxu0
    %345 = vmatprep.mubr.bf16.mxu0 0
    %346 = vmatmul.mubr.bf16.gmra.mxu0 %v302
    %v347 = vpop.f32.mrf.mxu0
    %v348 = vadd.f32 0.0, %v347
    %v349 = vpop.f32.mrf.mxu0
    %v350 = vpop.f32.mrf.mxu0
    %v351 = vadd.f32 0.0, %v350
    %v352 = vpop.f32.mrf.mxu0
    %353 = vdwg.mxu0
    %s354 = sld [smem:[#allocation2]]
    %s355 = sadd.f32 %s354, 1.0
    %v356 = vstv %s355
    %v357 = vmul.f32 %v356, %v101
    %v358 = vmul.f32 %v356, %v102
    %v359 = vmul.f32 %v356, %v103
    %v360 = vmul.f32 %v356, %v104
    %v361 = vadd.f32 %v357, %v340
    %v362 = vadd.f32 %v358, %v343
    %v363 = vadd.f32 %v359, %v348
    %v364 = vadd.f32 %v360, %v351
    %v365 = vld [vmem:[%s5] sm:$0xff]
    %v366 = vld [vmem:[%s5 + $0x8] sm:$0xff]
    %v367 = vld [vmem:[%s5 + $0x10] sm:$0xff]
    %v368 = vld [vmem:[%s5 + $0x18] sm:$0xff]
    %v369 = vld [vmem:[%s5 + $0x20] sm:$0xff]
    %v370 = vld [vmem:[%s5 + $0x28] sm:$0xff]
    %v371 = vld [vmem:[%s5 + $0x30] sm:$0xff]
    %v372 = vld [vmem:[%s5 + $0x38] sm:$0xff]
    %v373 = vld [vmem:[%s5 + $0x40] sm:$0xff]
    %v374 = vld [vmem:[%s5 + $0x48] sm:$0xff]
    %v375 = vld [vmem:[%s5 + $0x50] sm:$0xff]
    %v376 = vld [vmem:[%s5 + $0x58] sm:$0xff]
    %v377 = vld [vmem:[%s5 + $0x60] sm:$0xff]
    %v378 = vld [vmem:[%s5 + $0x68] sm:$0xff]
    %v379 = vld [vmem:[%s5 + $0x70] sm:$0xff]
    %v380 = vld [vmem:[%s5 + $0x78] sm:$0xff]
    %381 = vmatprep.subr.mxu0 0.0
    %382 = vmatpush1.msra.mxu0 %v380
    %383 = vmatprep.subr.mxu0 0.0
    %384 = vmatpush1.msra.mxu0 %v379
    %385 = vmatprep.subr.mxu0 0.0
    %386 = vmatpush1.msra.mxu0 %v378
    %387 = vmatprep.subr.mxu0 0.0
    %388 = vmatpush1.msra.mxu0 %v377
    %389 = vmatprep.subr.mxu0 0.0
    %390 = vmatpush1.msra.mxu0 %v376
    %391 = vmatprep.subr.mxu0 0.0
    %392 = vmatpush1.msra.mxu0 %v375
    %393 = vmatprep.subr.mxu0 0.0
    %394 = vmatpush1.msra.mxu0 %v374
    %395 = vmatprep.subr.mxu0 0.0
    %396 = vmatpush1.msra.mxu0 %v373
    %397 = vmatprep.subr.mxu0 0.0
    %398 = vmatpush1.msra.mxu0 %v372
    %399 = vmatprep.subr.mxu0 0.0
    %400 = vmatpush1.msra.mxu0 %v371
    %401 = vmatprep.subr.mxu0 0.0
    %402 = vmatpush1.msra.mxu0 %v370
    %403 = vmatprep.subr.mxu0 0.0
    %404 = vmatpush1.msra.mxu0 %v369
    %405 = vmatprep.subr.mxu0 0.0
    %406 = vmatpush1.msra.mxu0 %v368
    %407 = vmatprep.subr.mxu0 0.0
    %408 = vmatpush1.msra.mxu0 %v367
    %409 = vmatprep.subr.mxu0 0.0
    %410 = vmatpush1.msra.mxu0 %v366
    %411 = vmatprep.subr.mxu0 0.0
    %412 = vmatpush1.msra.mxu0 %v365
    %413 = vmatprep.subr.mxu0 0.0
    %414 = vmatpush2.msra.mxu0 0.0
    %415 = vmatprep.subr.mxu0 0.0
    %416 = vmatpush2.msra.mxu0 0.0
    %417 = vmatprep.subr.mxu0 0.0
    %418 = vmatpush2.msra.mxu0 0.0
    %419 = vmatprep.subr.mxu0 0.0
    %420 = vmatpush2.msra.mxu0 0.0
    %421 = vmatprep.subr.mxu0 0.0
    %422 = vmatpush2.msra.mxu0 0.0
    %423 = vmatprep.subr.mxu0 0.0
    %424 = vmatpush2.msra.mxu0 0.0
    %425 = vmatprep.subr.mxu0 0.0
    %426 = vmatpush2.msra.mxu0 0.0
    %427 = vmatprep.subr.mxu0 0.0
    %428 = vmatpush2.msra.mxu0 0.0
    %429 = vmatprep.subr.mxu0 0.0
    %430 = vmatpush2.msra.mxu0 0.0
    %431 = vmatprep.subr.mxu0 0.0
    %432 = vmatpush2.msra.mxu0 0.0
    %433 = vmatprep.subr.mxu0 0.0
    %434 = vmatpush2.msra.mxu0 0.0
    %435 = vmatprep.subr.mxu0 0.0
    %436 = vmatpush2.msra.mxu0 0.0
    %437 = vmatprep.subr.mxu0 0.0
    %438 = vmatpush2.msra.mxu0 0.0
    %439 = vmatprep.subr.mxu0 0.0
    %440 = vmatpush2.msra.mxu0 0.0
    %441 = vmatprep.subr.mxu0 0.0
    %442 = vmatpush2.msra.mxu0 0.0
    %443 = vmatprep.subr.mxu0 0.0
    %444 = vmatpush2.msra.mxu0 0.0
    %445 = vmatprep.mubr.f32.mxu0 0.0
    %446 = vmatmul.mubr.f32.gmra.mxu0 %v361
    %v447 = vpop.f32.mrf.mxu0
    %v448 = vadd.f32 0.0, %v447
    %v449 = vpop.f32.mrf.mxu0
    %450 = vmatprep.mubr.f32.mxu0 0.0
    %451 = vmatmul.mubr.f32.gmra.mxu0 %v362
    %v452 = vpop.f32.mrf.mxu0
    %v453 = vadd.f32 0.0, %v452
    %v454 = vpop.f32.mrf.mxu0
    %455 = vmatprep.mubr.f32.mxu0 0.0
    %456 = vmatmul.mubr.f32.gmra.mxu0 %v363
    %v457 = vpop.f32.mrf.mxu0
    %v458 = vadd.f32 0.0, %v457
    %v459 = vpop.f32.mrf.mxu0
    %460 = vmatprep.mubr.f32.mxu0 0.0
    %461 = vmatmul.mubr.f32.gmra.mxu0 %v364
    %v462 = vpop.f32.mrf.mxu0
    %v463 = vadd.f32 0.0, %v462
    %v464 = vpop.f32.mrf.mxu0
    %465 = vdwg.mxu0
    %v466 = vld [vmem:[%s6] sm:$0x1]
    %v468 = vlaneseq
    %v469 = vshrl.u32 %v468, 7
    %v470 = vsub.s32 0, %v469
    %v471 = vrot.slane %v466, %v470
    %v473 = vmul.f32 %v448, %v471
    %v474 = vmul.f32 %v453, %v471
    %v475 = vmul.f32 %v458, %v471
    %v476 = vmul.f32 %v463, %v471
    %v477 = vld [vmem:[%s7] sm:$0x1]
    %v479 = vlaneseq
    %v480 = vshrl.u32 %v479, 7
    %v481 = vsub.s32 0, %v480
    %v482 = vrot.slane %v477, %v481
    %v484 = vadd.f32 %v473, %v482
    %v485 = vadd.f32 %v474, %v482
    %v486 = vadd.f32 %v475, %v482
    %v487 = vadd.f32 %v476, %v482
    %v488 = vmax.f32 %v484, 0.0
    %v489 = vmax.f32 %v485, 0.0
    %v490 = vmax.f32 %v486, 0.0
    %v491 = vmax.f32 %v487, 0.0
    %v492 = vadd.f32 %v488, %v101
    %v493 = vadd.f32 %v489, %v102
    %v494 = vadd.f32 %v490, %v103
    %v495 = vadd.f32 %v491, %v104
    %v496 = vpack.c.bf16 %v493, %v492
    %v497 = vpack.c.bf16 %v495, %v494
    %498 = vmatprep.subr.bf16.mxu0 0
    %499 = vmatpush1.bf16.msra.mxu0 0
    %500 = vmatprep.subr.bf16.mxu0 0
    %501 = vmatpush1.bf16.msra.mxu0 0
    %502 = vmatprep.subr.bf16.mxu0 0
    %503 = vmatpush1.bf16.msra.mxu0 0
    %504 = vmatprep.subr.bf16.mxu0 0
    %505 = vmatpush1.bf16.msra.mxu0 0
    %506 = vmatprep.subr.bf16.mxu0 0
    %507 = vmatpush1.bf16.msra.mxu0 0
    %508 = vmatprep.subr.bf16.mxu0 0
    %509 = vmatpush1.bf16.msra.mxu0 0
    %510 = vmatprep.subr.bf16.mxu0 0
    %511 = vmatpush1.bf16.msra.mxu0 %v497
    %512 = vmatprep.subr.bf16.mxu0 0
    %513 = vmatpush1.bf16.msra.mxu0 %v496
    %514 = vmatprep.subr.bf16.mxu0 0
    %515 = vmatpush2.bf16.msra.mxu0 0
    %516 = vmatprep.subr.bf16.mxu0 0
    %517 = vmatpush2.bf16.msra.mxu0 0
    %518 = vmatprep.subr.bf16.mxu0 0
    %519 = vmatpush2.bf16.msra.mxu0 0
    %520 = vmatprep.subr.bf16.mxu0 0
    %521 = vmatpush2.bf16.msra.mxu0 0
    %522 = vmatprep.subr.bf16.mxu0 0
    %523 = vmatpush2.bf16.msra.mxu0 0
    %524 = vmatprep.subr.bf16.mxu0 0
    %525 = vmatpush2.bf16.msra.mxu0 0
    %526 = vmatprep.subr.bf16.mxu0 0
    %527 = vmatpush2.bf16.msra.mxu0 0
    %528 = vmatprep.subr.bf16.mxu0 0
    %529 = vmatpush2.bf16.msra.mxu0 0
    %530 = vmatprep.mubr.bf16.mxu0 0
    %531 = vmatmul.mubr.bf16.gmra.mxu0 %v149
    %v532 = vpop.f32.mrf.mxu0
    %v533 = vadd.f32 %v85, %v532
    %v534 = vpop.f32.mrf.mxu0
    %v535 = vpop.f32.mrf.mxu0
    %v536 = vadd.f32 %v86, %v535
    %v537 = vpop.f32.mrf.mxu0
    %538 = vmatprep.mubr.bf16.mxu0 0
    %539 = vmatmul.mubr.bf16.gmra.mxu0 %v152
    %v540 = vpop.f32.mrf.mxu0
    %v541 = vadd.f32 %v87, %v540
    %v542 = vpop.f32.mrf.mxu0
    %v543 = vpop.f32.mrf.mxu0
    %v544 = vadd.f32 %v88, %v543
    %v545 = vpop.f32.mrf.mxu0
    %546 = vmatprep.mubr.bf16.mxu0 0
    %547 = vmatmul.mubr.bf16.gmra.mxu0 %v155
    %v548 = vpop.f32.mrf.mxu0
    %v549 = vadd.f32 %v89, %v548
    %v550 = vpop.f32.mrf.mxu0
    %v551 = vpop.f32.mrf.mxu0
    %v552 = vadd.f32 %v90, %v551
    %v553 = vpop.f32.mrf.mxu0
    %554 = vmatprep.mubr.bf16.mxu0 0
    %555 = vmatmul.mubr.bf16.gmra.mxu0 %v158
    %v556 = vpop.f32.mrf.mxu0
    %v557 = vadd.f32 %v91, %v556
    %v558 = vpop.f32.mrf.mxu0
    %v559 = vpop.f32.mrf.mxu0
    %v560 = vadd.f32 %v92, %v559
    %v561 = vpop.f32.mrf.mxu0
    %562 = vmatprep.mubr.bf16.mxu0 0
    %563 = vmatmul.mubr.bf16.gmra.mxu0 %v161
    %v564 = vpop.f32.mrf.mxu0
    %v565 = vadd.f32 %v93, %v564
    %v566 = vpop.f32.mrf.mxu0
    %v567 = vpop.f32.mrf.mxu0
    %v568 = vadd.f32 %v94, %v567
    %v569 = vpop.f32.mrf.mxu0
    %570 = vmatprep.mubr.bf16.mxu0 0
    %571 = vmatmul.mubr.bf16.gmra.mxu0 %v164
    %v572 = vpop.f32.mrf.mxu0
    %v573 = vadd.f32 %v95, %v572
    %v574 = vpop.f32.mrf.mxu0
    %v575 = vpop.f32.mrf.mxu0
    %v576 = vadd.f32 %v96, %v575
    %v577 = vpop.f32.mrf.mxu0
    %578 = vmatprep.mubr.bf16.mxu0 0
    %579 = vmatmul.mubr.bf16.gmra.mxu0 %v167
    %v580 = vpop.f32.mrf.mxu0
    %v581 = vadd.f32 %v97, %v580
    %v582 = vpop.f32.mrf.mxu0
    %v583 = vpop.f32.mrf.mxu0
    %v584 = vadd.f32 %v98, %v583
    %v585 = vpop.f32.mrf.mxu0
    %586 = vmatprep.mubr.bf16.mxu0 0
    %587 = vmatmul.mubr.bf16.gmra.mxu0 %v170
    %v588 = vpop.f32.mrf.mxu0
    %v589 = vadd.f32 %v99, %v588
    %v590 = vpop.f32.mrf.mxu0
    %v591 = vpop.f32.mrf.mxu0
    %v592 = vadd.f32 %v100, %v591
    %v593 = vpop.f32.mrf.mxu0
    %594 = vdwg.mxu0
    %v595 = vmax.f32 %v533, 0.0
    %v596 = vmax.f32 %v536, 0.0
    %v597 = vmax.f32 %v541, 0.0
    %v598 = vmax.f32 %v544, 0.0
    %v599 = vmax.f32 %v549, 0.0
    %v600 = vmax.f32 %v552, 0.0
    %v601 = vmax.f32 %v557, 0.0
    %v602 = vmax.f32 %v560, 0.0
    %v603 = vmax.f32 %v565, 0.0
    %v604 = vmax.f32 %v568, 0.0
    %v605 = vmax.f32 %v573, 0.0
    %v606 = vmax.f32 %v576, 0.0
    %v607 = vmax.f32 %v581, 0.0
    %v608 = vmax.f32 %v584, 0.0
    %v609 = vmax.f32 %v589, 0.0
    %v610 = vmax.f32 %v592, 0.0
    %v611 = vpack.c.bf16 %v596, %v595
    %v612 = vpack.c.bf16 %v598, %v597
    %v613 = vpack.c.bf16 %v600, %v599
    %v614 = vpack.c.bf16 %v602, %v601
    %v615 = vpack.c.bf16 %v604, %v603
    %v616 = vpack.c.bf16 %v606, %v605
    %v617 = vpack.c.bf16 %v608, %v607
    %v618 = vpack.c.bf16 %v610, %v609
    %619 = vmatprep.subr.bf16.mxu0 0
    %620 = vmatpush1.bf16.msra.mxu0 %v618
    %621 = vmatprep.subr.bf16.mxu0 0
    %622 = vmatpush1.bf16.msra.mxu0 %v617
    %623 = vmatprep.subr.bf16.mxu0 0
    %624 = vmatpush1.bf16.msra.mxu0 %v616
    %625 = vmatprep.subr.bf16.mxu0 0
    %626 = vmatpush1.bf16.msra.mxu0 %v615
    %627 = vmatprep.subr.bf16.mxu0 0
    %628 = vmatpush1.bf16.msra.mxu0 %v614
    %629 = vmatprep.subr.bf16.mxu0 0
    %630 = vmatpush1.bf16.msra.mxu0 %v613
    %631 = vmatprep.subr.bf16.mxu0 0
    %632 = vmatpush1.bf16.msra.mxu0 %v612
    %633 = vmatprep.subr.bf16.mxu0 0
    %634 = vmatpush1.bf16.msra.mxu0 %v611
    %635 = vmatprep.subr.bf16.mxu0 0
    %636 = vmatpush2.bf16.msra.mxu0 0
    %637 = vmatprep.subr.bf16.mxu0 0
    %638 = vmatpush2.bf16.msra.mxu0 0
    %639 = vmatprep.subr.bf16.mxu0 0
    %640 = vmatpush2.bf16.msra.mxu0 0
    %641 = vmatprep.subr.bf16.mxu0 0
    %642 = vmatpush2.bf16.msra.mxu0 0
    %643 = vmatprep.subr.bf16.mxu0 0
    %644 = vmatpush2.bf16.msra.mxu0 0
    %645 = vmatprep.subr.bf16.mxu0 0
    %646 = vmatpush2.bf16.msra.mxu0 0
    %647 = vmatprep.subr.bf16.mxu0 0
    %648 = vmatpush2.bf16.msra.mxu0 0
    %649 = vmatprep.subr.bf16.mxu0 0
    %650 = vmatpush2.bf16.msra.mxu0 0
    %651 = vmatprep.mubr.bf16.mxu0 0
    %652 = vmatmul.mubr.bf16.gmra.mxu0 %v301
    %v653 = vpop.f32.mrf.mxu0
    %v654 = vadd.f32 0.0, %v653
    %v655 = vpop.f32.mrf.mxu0
    %v656 = vpop.f32.mrf.mxu0
    %v657 = vadd.f32 0.0, %v656
    %v658 = vpop.f32.mrf.mxu0
    %659 = vmatprep.mubr.bf16.mxu0 0
    %660 = vmatmul.mubr.bf16.gmra.mxu0 %v302
    %v661 = vpop.f32.mrf.mxu0
    %v662 = vadd.f32 0.0, %v661
    %v663 = vpop.f32.mrf.mxu0
    %v664 = vpop.f32.mrf.mxu0
    %v665 = vadd.f32 0.0, %v664
    %v666 = vpop.f32.mrf.mxu0
    %667 = vdwg.mxu0
    %s668 = sld [smem:[#allocation2 + $0x1]]
    %s669 = sadd.f32 %s668, 1.0
    %v670 = vstv %s669
    %v671 = vmul.f32 %v670, %v492
    %v672 = vmul.f32 %v670, %v493
    %v673 = vmul.f32 %v670, %v494
    %v674 = vmul.f32 %v670, %v495
    %v675 = vadd.f32 %v671, %v654
    %v676 = vadd.f32 %v672, %v657
    %v677 = vadd.f32 %v673, %v662
    %v678 = vadd.f32 %v674, %v665
    %s679 = scalar_lea.vmem %s5, 128
    %v680 = vld [vmem:[%s679] sm:$0xff]
    %v681 = vld [vmem:[%s679 + $0x8] sm:$0xff]
    %v682 = vld [vmem:[%s679 + $0x10] sm:$0xff]
    %v683 = vld [vmem:[%s679 + $0x18] sm:$0xff]
    %v684 = vld [vmem:[%s679 + $0x20] sm:$0xff]
    %v685 = vld [vmem:[%s679 + $0x28] sm:$0xff]
    %v686 = vld [vmem:[%s679 + $0x30] sm:$0xff]
    %v687 = vld [vmem:[%s679 + $0x38] sm:$0xff]
    %v688 = vld [vmem:[%s679 + $0x40] sm:$0xff]
    %v689 = vld [vmem:[%s679 + $0x48] sm:$0xff]
    %v690 = vld [vmem:[%s679 + $0x50] sm:$0xff]
    %v691 = vld [vmem:[%s679 + $0x58] sm:$0xff]
    %v692 = vld [vmem:[%s679 + $0x60] sm:$0xff]
    %v693 = vld [vmem:[%s679 + $0x68] sm:$0xff]
    %v694 = vld [vmem:[%s679 + $0x70] sm:$0xff]
    %v695 = vld [vmem:[%s679 + $0x78] sm:$0xff]
    %696 = vmatprep.subr.mxu0 0.0
    %697 = vmatpush1.msra.mxu0 %v695
    %698 = vmatprep.subr.mxu0 0.0
    %699 = vmatpush1.msra.mxu0 %v694
    %700 = vmatprep.subr.mxu0 0.0
    %701 = vmatpush1.msra.mxu0 %v693
    %702 = vmatprep.subr.mxu0 0.0
    %703 = vmatpush1.msra.mxu0 %v692
    %704 = vmatprep.subr.mxu0 0.0
    %705 = vmatpush1.msra.mxu0 %v691
    %706 = vmatprep.subr.mxu0 0.0
    %707 = vmatpush1.msra.mxu0 %v690
    %708 = vmatprep.subr.mxu0 0.0
    %709 = vmatpush1.msra.mxu0 %v689
    %710 = vmatprep.subr.mxu0 0.0
    %711 = vmatpush1.msra.mxu0 %v688
    %712 = vmatprep.subr.mxu0 0.0
    %713 = vmatpush1.msra.mxu0 %v687
    %714 = vmatprep.subr.mxu0 0.0
    %715 = vmatpush1.msra.mxu0 %v686
    %716 = vmatprep.subr.mxu0 0.0
    %717 = vmatpush1.msra.mxu0 %v685
    %718 = vmatprep.subr.mxu0 0.0
    %719 = vmatpush1.msra.mxu0 %v684
    %720 = vmatprep.subr.mxu0 0.0
    %721 = vmatpush1.msra.mxu0 %v683
    %722 = vmatprep.subr.mxu0 0.0
    %723 = vmatpush1.msra.mxu0 %v682
    %724 = vmatprep.subr.mxu0 0.0
    %725 = vmatpush1.msra.mxu0 %v681
    %726 = vmatprep.subr.mxu0 0.0
    %727 = vmatpush1.msra.mxu0 %v680
    %728 = vmatprep.subr.mxu0 0.0
    %729 = vmatpush2.msra.mxu0 0.0
    %730 = vmatprep.subr.mxu0 0.0
    %731 = vmatpush2.msra.mxu0 0.0
    %732 = vmatprep.subr.mxu0 0.0
    %733 = vmatpush2.msra.mxu0 0.0
    %734 = vmatprep.subr.mxu0 0.0
    %735 = vmatpush2.msra.mxu0 0.0
    %736 = vmatprep.subr.mxu0 0.0
    %737 = vmatpush2.msra.mxu0 0.0
    %738 = vmatprep.subr.mxu0 0.0
    %739 = vmatpush2.msra.mxu0 0.0
    %740 = vmatprep.subr.mxu0 0.0
    %741 = vmatpush2.msra.mxu0 0.0
    %742 = vmatprep.subr.mxu0 0.0
    %743 = vmatpush2.msra.mxu0 0.0
    %744 = vmatprep.subr.mxu0 0.0
    %745 = vmatpush2.msra.mxu0 0.0
    %746 = vmatprep.subr.mxu0 0.0
    %747 = vmatpush2.msra.mxu0 0.0
    %748 = vmatprep.subr.mxu0 0.0
    %749 = vmatpush2.msra.mxu0 0.0
    %750 = vmatprep.subr.mxu0 0.0
    %751 = vmatpush2.msra.mxu0 0.0
    %752 = vmatprep.subr.mxu0 0.0
    %753 = vmatpush2.msra.mxu0 0.0
    %754 = vmatprep.subr.mxu0 0.0
    %755 = vmatpush2.msra.mxu0 0.0
    %756 = vmatprep.subr.mxu0 0.0
    %757 = vmatpush2.msra.mxu0 0.0
    %758 = vmatprep.subr.mxu0 0.0
    %759 = vmatpush2.msra.mxu0 0.0
    %760 = vmatprep.mubr.f32.mxu0 0.0
    %761 = vmatmul.mubr.f32.gmra.mxu0 %v675
    %v762 = vpop.f32.mrf.mxu0
    %v763 = vadd.f32 0.0, %v762
    %v764 = vpop.f32.mrf.mxu0
    %765 = vmatprep.mubr.f32.mxu0 0.0
    %766 = vmatmul.mubr.f32.gmra.mxu0 %v676
    %v767 = vpop.f32.mrf.mxu0
    %v768 = vadd.f32 0.0, %v767
    %v769 = vpop.f32.mrf.mxu0
    %770 = vmatprep.mubr.f32.mxu0 0.0
    %771 = vmatmul.mubr.f32.gmra.mxu0 %v677
    %v772 = vpop.f32.mrf.mxu0
    %v773 = vadd.f32 0.0, %v772
    %v774 = vpop.f32.mrf.mxu0
    %775 = vmatprep.mubr.f32.mxu0 0.0
    %776 = vmatmul.mubr.f32.gmra.mxu0 %v678
    %v777 = vpop.f32.mrf.mxu0
    %v778 = vadd.f32 0.0, %v777
    %v779 = vpop.f32.mrf.mxu0
    %780 = vdwg.mxu0
    %s781 = scalar_lea.vmem %s6, 1
    %v782 = vld [vmem:[%s781] sm:$0x1]
    %v784 = vlaneseq
    %v785 = vshrl.u32 %v784, 7
    %v786 = vsub.s32 0, %v785
    %v787 = vrot.slane %v782, %v786
    %v789 = vmul.f32 %v763, %v787
    %v790 = vmul.f32 %v768, %v787
    %v791 = vmul.f32 %v773, %v787
    %v792 = vmul.f32 %v778, %v787
    %s793 = scalar_lea.vmem %s7, 1
    %v794 = vld [vmem:[%s793] sm:$0x1]
    %v796 = vlaneseq
    %v797 = vshrl.u32 %v796, 7
    %v798 = vsub.s32 0, %v797
    %v799 = vrot.slane %v794, %v798
    %v801 = vadd.f32 %v789, %v799
    %v802 = vadd.f32 %v790, %v799
    %v803 = vadd.f32 %v791, %v799
    %v804 = vadd.f32 %v792, %v799
    %v805 = vmax.f32 %v801, 0.0
    %v806 = vmax.f32 %v802, 0.0
    %v807 = vmax.f32 %v803, 0.0
    %v808 = vmax.f32 %v804, 0.0
    %v809 = vadd.f32 %v805, %v492
    %v810 = vadd.f32 %v806, %v493
    %v811 = vadd.f32 %v807, %v494
    %v812 = vadd.f32 %v808, %v495
    %v813 = vpack.c.bf16 %v810, %v809
    %v814 = vpack.c.bf16 %v812, %v811
    %815 = vmatprep.subr.bf16.mxu0 0
    %816 = vmatpush1.bf16.msra.mxu0 0
    %817 = vmatprep.subr.bf16.mxu0 0
    %818 = vmatpush1.bf16.msra.mxu0 0
    %819 = vmatprep.subr.bf16.mxu0 0
    %820 = vmatpush1.bf16.msra.mxu0 0
    %821 = vmatprep.subr.bf16.mxu0 0
    %822 = vmatpush1.bf16.msra.mxu0 0
    %823 = vmatprep.subr.bf16.mxu0 0
    %824 = vmatpush1.bf16.msra.mxu0 0
    %825 = vmatprep.subr.bf16.mxu0 0
    %826 = vmatpush1.bf16.msra.mxu0 0
    %827 = vmatprep.subr.bf16.mxu0 0
    %828 = vmatpush1.bf16.msra.mxu0 %v814
    %829 = vmatprep.subr.bf16.mxu0 0
    %830 = vmatpush1.bf16.msra.mxu0 %v813
    %831 = vmatprep.subr.bf16.mxu0 0
    %832 = vmatpush2.bf16.msra.mxu0 0
    %833 = vmatprep.subr.bf16.mxu0 0
    %834 = vmatpush2.bf16.msra.mxu0 0
    %835 = vmatprep.subr.bf16.mxu0 0
    %836 = vmatpush2.bf16.msra.mxu0 0
    %837 = vmatprep.subr.bf16.mxu0 0
    %838 = vmatpush2.bf16.msra.mxu0 0
    %839 = vmatprep.subr.bf16.mxu0 0
    %840 = vmatpush2.bf16.msra.mxu0 0
    %841 = vmatprep.subr.bf16.mxu0 0
    %842 = vmatpush2.bf16.msra.mxu0 0
    %843 = vmatprep.subr.bf16.mxu0 0
    %844 = vmatpush2.bf16.msra.mxu0 0
    %845 = vmatprep.subr.bf16.mxu0 0
    %846 = vmatpush2.bf16.msra.mxu0 0
    %847 = vmatprep.mubr.bf16.mxu0 0
    %848 = vmatmul.mubr.bf16.gmra.mxu0 %v149
    %v849 = vpop.f32.mrf.mxu0
    %v850 = vadd.f32 %v85, %v849
    %v851 = vpop.f32.mrf.mxu0
    %v852 = vpop.f32.mrf.mxu0
    %v853 = vadd.f32 %v86, %v852
    %v854 = vpop.f32.mrf.mxu0
    %855 = vmatprep.mubr.bf16.mxu0 0
    %856 = vmatmul.mubr.bf16.gmra.mxu0 %v152
    %v857 = vpop.f32.mrf.mxu0
    %v858 = vadd.f32 %v87, %v857
    %v859 = vpop.f32.mrf.mxu0
    %v860 = vpop.f32.mrf.mxu0
    %v861 = vadd.f32 %v88, %v860
    %v862 = vpop.f32.mrf.mxu0
    %863 = vmatprep.mubr.bf16.mxu0 0
    %864 = vmatmul.mubr.bf16.gmra.mxu0 %v155
    %v865 = vpop.f32.mrf.mxu0
    %v866 = vadd.f32 %v89, %v865
    %v867 = vpop.f32.mrf.mxu0
    %v868 = vpop.f32.mrf.mxu0
    %v869 = vadd.f32 %v90, %v868
    %v870 = vpop.f32.mrf.mxu0
    %871 = vmatprep.mubr.bf16.mxu0 0
    %872 = vmatmul.mubr.bf16.gmra.mxu0 %v158
    %v873 = vpop.f32.mrf.mxu0
    %v874 = vadd.f32 %v91, %v873
    %v875 = vpop.f32.mrf.mxu0
    %v876 = vpop.f32.mrf.mxu0
    %v877 = vadd.f32 %v92, %v876
    %v878 = vpop.f32.mrf.mxu0
    %879 = vmatprep.mubr.bf16.mxu0 0
    %880 = vmatmul.mubr.bf16.gmra.mxu0 %v161
    %v881 = vpop.f32.mrf.mxu0
    %v882 = vadd.f32 %v93, %v881
    %v883 = vpop.f32.mrf.mxu0
    %v884 = vpop.f32.mrf.mxu0
    %v885 = vadd.f32 %v94, %v884
    %v886 = vpop.f32.mrf.mxu0
    %887 = vmatprep.mubr.bf16.mxu0 0
    %888 = vmatmul.mubr.bf16.gmra.mxu0 %v164
    %v889 = vpop.f32.mrf.mxu0
    %v890 = vadd.f32 %v95, %v889
    %v891 = vpop.f32.mrf.mxu0
    %v892 = vpop.f32.mrf.mxu0
    %v893 = vadd.f32 %v96, %v892
    %v894 = vpop.f32.mrf.mxu0
    %895 = vmatprep.mubr.bf16.mxu0 0
    %896 = vmatmul.mubr.bf16.gmra.mxu0 %v167
    %v897 = vpop.f32.mrf.mxu0
    %v898 = vadd.f32 %v97, %v897
    %v899 = vpop.f32.mrf.mxu0
    %v900 = vpop.f32.mrf.mxu0
    %v901 = vadd.f32 %v98, %v900
    %v902 = vpop.f32.mrf.mxu0
    %903 = vmatprep.mubr.bf16.mxu0 0
    %904 = vmatmul.mubr.bf16.gmra.mxu0 %v170
    %v905 = vpop.f32.mrf.mxu0
    %v906 = vadd.f32 %v99, %v905
    %v907 = vpop.f32.mrf.mxu0
    %v908 = vpop.f32.mrf.mxu0
    %v909 = vadd.f32 %v100, %v908
    %v910 = vpop.f32.mrf.mxu0
    %911 = vdwg.mxu0
    %v912 = vmax.f32 %v850, 0.0
    %v913 = vmax.f32 %v853, 0.0
    %v914 = vmax.f32 %v858, 0.0
    %v915 = vmax.f32 %v861, 0.0
    %v916 = vmax.f32 %v866, 0.0
    %v917 = vmax.f32 %v869, 0.0
    %v918 = vmax.f32 %v874, 0.0
    %v919 = vmax.f32 %v877, 0.0
    %v920 = vmax.f32 %v882, 0.0
    %v921 = vmax.f32 %v885, 0.0
    %v922 = vmax.f32 %v890, 0.0
    %v923 = vmax.f32 %v893, 0.0
    %v924 = vmax.f32 %v898, 0.0
    %v925 = vmax.f32 %v901, 0.0
    %v926 = vmax.f32 %v906, 0.0
    %v927 = vmax.f32 %v909, 0.0
    %v928 = vpack.c.bf16 %v913, %v912
    %v929 = vpack.c.bf16 %v915, %v914
    %v930 = vpack.c.bf16 %v917, %v916
    %v931 = vpack.c.bf16 %v919, %v918
    %v932 = vpack.c.bf16 %v921, %v920
    %v933 = vpack.c.bf16 %v923, %v922
    %v934 = vpack.c.bf16 %v925, %v924
    %v935 = vpack.c.bf16 %v927, %v926
    %936 = vmatprep.subr.bf16.mxu0 0
    %937 = vmatpush1.bf16.msra.mxu0 %v935
    %938 = vmatprep.subr.bf16.mxu0 0
    %939 = vmatpush1.bf16.msra.mxu0 %v934
    %940 = vmatprep.subr.bf16.mxu0 0
    %941 = vmatpush1.bf16.msra.mxu0 %v933
    %942 = vmatprep.subr.bf16.mxu0 0
    %943 = vmatpush1.bf16.msra.mxu0 %v932
    %944 = vmatprep.subr.bf16.mxu0 0
    %945 = vmatpush1.bf16.msra.mxu0 %v931
    %946 = vmatprep.subr.bf16.mxu0 0
    %947 = vmatpush1.bf16.msra.mxu0 %v930
    %948 = vmatprep.subr.bf16.mxu0 0
    %949 = vmatpush1.bf16.msra.mxu0 %v929
    %950 = vmatprep.subr.bf16.mxu0 0
    %951 = vmatpush1.bf16.msra.mxu0 %v928
    %952 = vmatprep.subr.bf16.mxu0 0
    %953 = vmatpush2.bf16.msra.mxu0 0
    %954 = vmatprep.subr.bf16.mxu0 0
    %955 = vmatpush2.bf16.msra.mxu0 0
    %956 = vmatprep.subr.bf16.mxu0 0
    %957 = vmatpush2.bf16.msra.mxu0 0
    %958 = vmatprep.subr.bf16.mxu0 0
    %959 = vmatpush2.bf16.msra.mxu0 0
    %960 = vmatprep.subr.bf16.mxu0 0
    %961 = vmatpush2.bf16.msra.mxu0 0
    %962 = vmatprep.subr.bf16.mxu0 0
    %963 = vmatpush2.bf16.msra.mxu0 0
    %964 = vmatprep.subr.bf16.mxu0 0
    %965 = vmatpush2.bf16.msra.mxu0 0
    %966 = vmatprep.subr.bf16.mxu0 0
    %967 = vmatpush2.bf16.msra.mxu0 0
    %968 = vmatprep.mubr.bf16.mxu0 0
    %969 = vmatmul.mubr.bf16.gmra.mxu0 %v301
    %v970 = vpop.f32.mrf.mxu0
    %v971 = vadd.f32 0.0, %v970
    %v972 = vpop.f32.mrf.mxu0
    %v973 = vpop.f32.mrf.mxu0
    %v974 = vadd.f32 0.0, %v973
    %v975 = vpop.f32.mrf.mxu0
    %976 = vmatprep.mubr.bf16.mxu0 0
    %977 = vmatmul.mubr.bf16.gmra.mxu0 %v302
    %v978 = vpop.f32.mrf.mxu0
    %v979 = vadd.f32 0.0, %v978
    %v980 = vpop.f32.mrf.mxu0
    %v981 = vpop.f32.mrf.mxu0
    %v982 = vadd.f32 0.0, %v981
    %v983 = vpop.f32.mrf.mxu0
    %984 = vdwg.mxu0
    %s985 = sld [smem:[#allocation2 + $0x2]]
    %s986 = sadd.f32 %s985, 1.0
    %v987 = vstv %s986
    %v988 = vmul.f32 %v987, %v809
    %v989 = vmul.f32 %v987, %v810
    %v990 = vmul.f32 %v987, %v811
    %v991 = vmul.f32 %v987, %v812
    %v992 = vadd.f32 %v988, %v971
    %v993 = vadd.f32 %v989, %v974
    %v994 = vadd.f32 %v990, %v979
    %v995 = vadd.f32 %v991, %v982
    %s996 = scalar_lea.vmem %s5, 256
    %v997 = vld [vmem:[%s996] sm:$0xff]
    %v998 = vld [vmem:[%s996 + $0x8] sm:$0xff]
    %v999 = vld [vmem:[%s996 + $0x10] sm:$0xff]
    %v1000 = vld [vmem:[%s996 + $0x18] sm:$0xff]
    %v1001 = vld [vmem:[%s996 + $0x20] sm:$0xff]
    %v1002 = vld [vmem:[%s996 + $0x28] sm:$0xff]
    %v1003 = vld [vmem:[%s996 + $0x30] sm:$0xff]
    %v1004 = vld [vmem:[%s996 + $0x38] sm:$0xff]
    %v1005 = vld [vmem:[%s996 + $0x40] sm:$0xff]
    %v1006 = vld [vmem:[%s996 + $0x48] sm:$0xff]
    %v1007 = vld [vmem:[%s996 + $0x50] sm:$0xff]
    %v1008 = vld [vmem:[%s996 + $0x58] sm:$0xff]
    %v1009 = vld [vmem:[%s996 + $0x60] sm:$0xff]
    %v1010 = vld [vmem:[%s996 + $0x68] sm:$0xff]
    %v1011 = vld [vmem:[%s996 + $0x70] sm:$0xff]
    %v1012 = vld [vmem:[%s996 + $0x78] sm:$0xff]
    %1013 = vmatprep.subr.mxu0 0.0
    %1014 = vmatpush1.msra.mxu0 %v1012
    %1015 = vmatprep.subr.mxu0 0.0
    %1016 = vmatpush1.msra.mxu0 %v1011
    %1017 = vmatprep.subr.mxu0 0.0
    %1018 = vmatpush1.msra.mxu0 %v1010
    %1019 = vmatprep.subr.mxu0 0.0
    %1020 = vmatpush1.msra.mxu0 %v1009
    %1021 = vmatprep.subr.mxu0 0.0
    %1022 = vmatpush1.msra.mxu0 %v1008
    %1023 = vmatprep.subr.mxu0 0.0
    %1024 = vmatpush1.msra.mxu0 %v1007
    %1025 = vmatprep.subr.mxu0 0.0
    %1026 = vmatpush1.msra.mxu0 %v1006
    %1027 = vmatprep.subr.mxu0 0.0
    %1028 = vmatpush1.msra.mxu0 %v1005
    %1029 = vmatprep.subr.mxu0 0.0
    %1030 = vmatpush1.msra.mxu0 %v1004
    %1031 = vmatprep.subr.mxu0 0.0
    %1032 = vmatpush1.msra.mxu0 %v1003
    %1033 = vmatprep.subr.mxu0 0.0
    %1034 = vmatpush1.msra.mxu0 %v1002
    %1035 = vmatprep.subr.mxu0 0.0
    %1036 = vmatpush1.msra.mxu0 %v1001
    %1037 = vmatprep.subr.mxu0 0.0
    %1038 = vmatpush1.msra.mxu0 %v1000
    %1039 = vmatprep.subr.mxu0 0.0
    %1040 = vmatpush1.msra.mxu0 %v999
    %1041 = vmatprep.subr.mxu0 0.0
    %1042 = vmatpush1.msra.mxu0 %v998
    %1043 = vmatprep.subr.mxu0 0.0
    %1044 = vmatpush1.msra.mxu0 %v997
    %1045 = vmatprep.subr.mxu0 0.0
    %1046 = vmatpush2.msra.mxu0 0.0
    %1047 = vmatprep.subr.mxu0 0.0
    %1048 = vmatpush2.msra.mxu0 0.0
    %1049 = vmatprep.subr.mxu0 0.0
    %1050 = vmatpush2.msra.mxu0 0.0
    %1051 = vmatprep.subr.mxu0 0.0
    %1052 = vmatpush2.msra.mxu0 0.0
    %1053 = vmatprep.subr.mxu0 0.0
    %1054 = vmatpush2.msra.mxu0 0.0
    %1055 = vmatprep.subr.mxu0 0.0
    %1056 = vmatpush2.msra.mxu0 0.0
    %1057 = vmatprep.subr.mxu0 0.0
    %1058 = vmatpush2.msra.mxu0 0.0
    %1059 = vmatprep.subr.mxu0 0.0
    %1060 = vmatpush2.msra.mxu0 0.0
    %1061 = vmatprep.subr.mxu0 0.0
    %1062 = vmatpush2.msra.mxu0 0.0
    %1063 = vmatprep.subr.mxu0 0.0
    %1064 = vmatpush2.msra.mxu0 0.0
    %1065 = vmatprep.subr.mxu0 0.0
    %1066 = vmatpush2.msra.mxu0 0.0
    %1067 = vmatprep.subr.mxu0 0.0
    %1068 = vmatpush2.msra.mxu0 0.0
    %1069 = vmatprep.subr.mxu0 0.0
    %1070 = vmatpush2.msra.mxu0 0.0
    %1071 = vmatprep.subr.mxu0 0.0
    %1072 = vmatpush2.msra.mxu0 0.0
    %1073 = vmatprep.subr.mxu0 0.0
    %1074 = vmatpush2.msra.mxu0 0.0
    %1075 = vmatprep.subr.mxu0 0.0
    %1076 = vmatpush2.msra.mxu0 0.0
    %1077 = vmatprep.mubr.f32.mxu0 0.0
    %1078 = vmatmul.mubr.f32.gmra.mxu0 %v992
    %v1079 = vpop.f32.mrf.mxu0
    %v1080 = vadd.f32 0.0, %v1079
    %v1081 = vpop.f32.mrf.mxu0
    %1082 = vmatprep.mubr.f32.mxu0 0.0
    %1083 = vmatmul.mubr.f32.gmra.mxu0 %v993
    %v1084 = vpop.f32.mrf.mxu0
    %v1085 = vadd.f32 0.0, %v1084
    %v1086 = vpop.f32.mrf.mxu0
    %1087 = vmatprep.mubr.f32.mxu0 0.0
    %1088 = vmatmul.mubr.f32.gmra.mxu0 %v994
    %v1089 = vpop.f32.mrf.mxu0
    %v1090 = vadd.f32 0.0, %v1089
    %v1091 = vpop.f32.mrf.mxu0
    %1092 = vmatprep.mubr.f32.mxu0 0.0
    %1093 = vmatmul.mubr.f32.gmra.mxu0 %v995
    %v1094 = vpop.f32.mrf.mxu0
    %v1095 = vadd.f32 0.0, %v1094
    %v1096 = vpop.f32.mrf.mxu0
    %1097 = vdwg.mxu0
    %s1098 = scalar_lea.vmem %s6, 2
    %v1099 = vld [vmem:[%s1098] sm:$0x1]
    %v1101 = vlaneseq
    %v1102 = vshrl.u32 %v1101, 7
    %v1103 = vsub.s32 0, %v1102
    %v1104 = vrot.slane %v1099, %v1103
    %v1106 = vmul.f32 %v1080, %v1104
    %v1107 = vmul.f32 %v1085, %v1104
    %v1108 = vmul.f32 %v1090, %v1104
    %v1109 = vmul.f32 %v1095, %v1104
    %s1110 = scalar_lea.vmem %s7, 2
    %v1111 = vld [vmem:[%s1110] sm:$0x1]
    %v1113 = vlaneseq
    %v1114 = vshrl.u32 %v1113, 7
    %v1115 = vsub.s32 0, %v1114
    %v1116 = vrot.slane %v1111, %v1115
    %v1118 = vadd.f32 %v1106, %v1116
    %v1119 = vadd.f32 %v1107, %v1116
    %v1120 = vadd.f32 %v1108, %v1116
    %v1121 = vadd.f32 %v1109, %v1116
    %v1122 = vmax.f32 %v1118, 0.0
    %v1123 = vmax.f32 %v1119, 0.0
    %v1124 = vmax.f32 %v1120, 0.0
    %v1125 = vmax.f32 %v1121, 0.0
    %v1126 = vadd.f32 %v1122, %v809
    %v1127 = vadd.f32 %v1123, %v810
    %v1128 = vadd.f32 %v1124, %v811
    %v1129 = vadd.f32 %v1125, %v812
    %v1130 = vld [vmem:[%s8] sm:$0xff]
    %v1131 = vld [vmem:[%s8 + $0x8] sm:$0xff]
    %v1132 = vld [vmem:[%s8 + $0x10] sm:$0xff]
    %v1133 = vld [vmem:[%s8 + $0x18] sm:$0xff]
    %v1134 = vld [vmem:[%s8 + $0x20] sm:$0xff]
    %v1135 = vld [vmem:[%s8 + $0x28] sm:$0xff]
    %v1136 = vld [vmem:[%s8 + $0x30] sm:$0xff]
    %v1137 = vld [vmem:[%s8 + $0x38] sm:$0xff]
    %v1138 = vld [vmem:[%s8 + $0x40] sm:$0xff]
    %v1139 = vld [vmem:[%s8 + $0x48] sm:$0xff]
    %v1140 = vld [vmem:[%s8 + $0x50] sm:$0xff]
    %v1141 = vld [vmem:[%s8 + $0x58] sm:$0xff]
    %v1142 = vld [vmem:[%s8 + $0x60] sm:$0xff]
    %v1143 = vld [vmem:[%s8 + $0x68] sm:$0xff]
    %v1144 = vld [vmem:[%s8 + $0x70] sm:$0xff]
    %v1145 = vld [vmem:[%s8 + $0x78] sm:$0xff]
    %v1146 = vld [vmem:[%s9] sm:$0x1]
    %v1148 = vlaneseq
    %v1149 = vshrl.u32 %v1148, 7
    %v1150 = vsub.s32 0, %v1149
    %v1151 = vrot.slane %v1146, %v1150
    %1153 = vmatprep.subr.mxu0 0.0
    %1154 = vmatpush1.msra.mxu0 %v1145
    %1155 = vmatprep.subr.mxu0 0.0
    %1156 = vmatpush1.msra.mxu0 %v1144
    %1157 = vmatprep.subr.mxu0 0.0
    %1158 = vmatpush1.msra.mxu0 %v1143
    %1159 = vmatprep.subr.mxu0 0.0
    %1160 = vmatpush1.msra.mxu0 %v1142
    %1161 = vmatprep.subr.mxu0 0.0
    %1162 = vmatpush1.msra.mxu0 %v1141
    %1163 = vmatprep.subr.mxu0 0.0
    %1164 = vmatpush1.msra.mxu0 %v1140
    %1165 = vmatprep.subr.mxu0 0.0
    %1166 = vmatpush1.msra.mxu0 %v1139
    %1167 = vmatprep.subr.mxu0 0.0
    %1168 = vmatpush1.msra.mxu0 %v1138
    %1169 = vmatprep.subr.mxu0 0.0
    %1170 = vmatpush1.msra.mxu0 %v1137
    %1171 = vmatprep.subr.mxu0 0.0
    %1172 = vmatpush1.msra.mxu0 %v1136
    %1173 = vmatprep.subr.mxu0 0.0
    %1174 = vmatpush1.msra.mxu0 %v1135
    %1175 = vmatprep.subr.mxu0 0.0
    %1176 = vmatpush1.msra.mxu0 %v1134
    %1177 = vmatprep.subr.mxu0 0.0
    %1178 = vmatpush1.msra.mxu0 %v1133
    %1179 = vmatprep.subr.mxu0 0.0
    %1180 = vmatpush1.msra.mxu0 %v1132
    %1181 = vmatprep.subr.mxu0 0.0
    %1182 = vmatpush1.msra.mxu0 %v1131
    %1183 = vmatprep.subr.mxu0 0.0
    %1184 = vmatpush1.msra.mxu0 %v1130
    %1185 = vmatprep.subr.mxu0 0.0
    %1186 = vmatpush2.msra.mxu0 0.0
    %1187 = vmatprep.subr.mxu0 0.0
    %1188 = vmatpush2.msra.mxu0 0.0
    %1189 = vmatprep.subr.mxu0 0.0
    %1190 = vmatpush2.msra.mxu0 0.0
    %1191 = vmatprep.subr.mxu0 0.0
    %1192 = vmatpush2.msra.mxu0 0.0
    %1193 = vmatprep.subr.mxu0 0.0
    %1194 = vmatpush2.msra.mxu0 0.0
    %1195 = vmatprep.subr.mxu0 0.0
    %1196 = vmatpush2.msra.mxu0 0.0
    %1197 = vmatprep.subr.mxu0 0.0
    %1198 = vmatpush2.msra.mxu0 0.0
    %1199 = vmatprep.subr.mxu0 0.0
    %1200 = vmatpush2.msra.mxu0 0.0
    %1201 = vmatprep.subr.mxu0 0.0
    %1202 = vmatpush2.msra.mxu0 0.0
    %1203 = vmatprep.subr.mxu0 0.0
    %1204 = vmatpush2.msra.mxu0 0.0
    %1205 = vmatprep.subr.mxu0 0.0
    %1206 = vmatpush2.msra.mxu0 0.0
    %1207 = vmatprep.subr.mxu0 0.0
    %1208 = vmatpush2.msra.mxu0 0.0
    %1209 = vmatprep.subr.mxu0 0.0
    %1210 = vmatpush2.msra.mxu0 0.0
    %1211 = vmatprep.subr.mxu0 0.0
    %1212 = vmatpush2.msra.mxu0 0.0
    %1213 = vmatprep.subr.mxu0 0.0
    %1214 = vmatpush2.msra.mxu0 0.0
    %1215 = vmatprep.subr.mxu0 0.0
    %1216 = vmatpush2.msra.mxu0 0.0
    %1217 = vmatprep.mubr.f32.mxu0 0.0
    %1218 = vmatmul.mubr.f32.gmra.mxu0 %v1126
    %v1219 = vpop.f32.mrf.mxu0
    %v1220 = vadd.f32 %v1151, %v1219
    %v1221 = vpop.f32.mrf.mxu0
    %1222 = vmatprep.mubr.f32.mxu0 0.0
    %1223 = vmatmul.mubr.f32.gmra.mxu0 %v1127
    %v1224 = vpop.f32.mrf.mxu0
    %v1225 = vadd.f32 %v1151, %v1224
    %v1226 = vpop.f32.mrf.mxu0
    %1227 = vmatprep.mubr.f32.mxu0 0.0
    %1228 = vmatmul.mubr.f32.gmra.mxu0 %v1128
    %v1229 = vpop.f32.mrf.mxu0
    %v1230 = vadd.f32 %v1151, %v1229
    %v1231 = vpop.f32.mrf.mxu0
    %1232 = vmatprep.mubr.f32.mxu0 0.0
    %1233 = vmatmul.mubr.f32.gmra.mxu0 %v1129
    %v1234 = vpop.f32.mrf.mxu0
    %v1235 = vadd.f32 %v1151, %v1234
    %v1236 = vpop.f32.mrf.mxu0
    %1237 = vdwg.mxu0
    %1238 = vst [vmem:[%s10] sm:$0xff] %v1220
    %1239 = vst [vmem:[%s10 + $0x8] sm:$0xff] %v1225
    %1240 = vst [vmem:[%s10 + $0x10] sm:$0xff] %v1230
    %1241 = vst [vmem:[%s10 + $0x18] sm:$0xff] %v1235
    // Predicated region
    $region46: #{gnn_forward.1} parent=1 // pred_check
      _
    $region47: #{gnn_forward.1} parent=1 // pred_check_branch
      %1243 = sbr.rel (0) target = $region49
    $region48: #{gnn_forward.1} parent=1 // pred_region
      _
    $region49: #{gnn_forward.1} parent=1 // pred_fallthru
      _
    // Predicated region
    $region50: #{gnn_forward.1} parent=1 // pred_check
      _
    $region51: #{gnn_forward.1} parent=1 // pred_check_branch
      %1245 = sbr.rel (0) target = $region53
    $region52: #{gnn_forward.1} parent=1 // pred_region
      _
    $region53: #{gnn_forward.1} parent=1 // pred_fallthru
      _
    %1246 = vsyncpa [#allocation3], 1

</llo_original>
